<compile_context>
chip_gen: v7x
topology: tpu7x:2x2x1
jax: 0.10.0
libtpu: 0.0.40
codegen_flags: <defaults>
</compile_context>

<pallas_src>
from functools import partial

import jax
import jax.numpy as jnp
from jax.experimental import pallas as pl
from jax.experimental.pallas import tpu as pltpu


def _sinkhorn_kernel(logits_ref, out_ref, *, iterations, inv_temp):
    # logits_ref block: (B_BLK, S, S) f32, fully resident in VMEM.
    la = logits_ref[...].astype(jnp.float32)

    # Unrolled (trace-time) Sinkhorn iterations.
    for _ in range(iterations):
        # Row normalization: torch dim=2 -> axis=2 (cross-lane reduce).
        m = jnp.max(la, axis=2, keepdims=True)
        la = la - (m + jnp.log(jnp.sum(jnp.exp(la - m), axis=2, keepdims=True)))
        # Column normalization: torch dim=1 -> axis=1 (cross-sublane reduce).
        m = jnp.max(la, axis=1, keepdims=True)
        la = la - (m + jnp.log(jnp.sum(jnp.exp(la - m), axis=1, keepdims=True)))

    # Temperature applied AFTER the iterations, exactly as in the spec:
    # torch.exp(log_alpha / self.temperature).
    if inv_temp == 1.0:
        out_ref[...] = jnp.exp(la)
    else:
        out_ref[...] = jnp.exp(la * inv_temp)


def _pick_batch_block(batch, seq_len, max_block_bytes=4 << 20):
    """Largest divisor of `batch` whose block fits the VMEM budget and still
    leaves >= 2 grid steps (so both v7x TensorCores get work)."""
    per_batch_bytes = seq_len * seq_len * 4  # f32
    cap = max(1, max_block_bytes // per_batch_bytes)
    best = 1
    for cand in range(1, batch + 1):
        if batch % cand != 0 or cand > cap:
            continue
        steps = batch // cand
        if steps >= 2 or batch == 1:
            best = cand
    return best


def sinkhorn_normalize(logits, temperature=1.0, iterations=5, batch_block=None):
    """logits: [B, S, S]. Returns the Sinkhorn-normalized matrix, f32 [B, S, S]."""
    B, S, S2 = logits.shape
    assert S == S2, "logits must be [batch, seq_len, seq_len]"

    if batch_block is None:
        batch_block = _pick_batch_block(B, S)
    assert B % batch_block == 0
    grid = (B // batch_block,)
    inv_temp = 1.0 / float(temperature)

    kernel = partial(_sinkhorn_kernel, iterations=int(iterations), inv_temp=inv_temp)

    return pl.pallas_call(
        kernel,
        out_shape=jax.ShapeDtypeStruct((B, S, S), jnp.float32),
        grid_spec=pltpu.PrefetchScalarGridSpec(
            num_scalar_prefetch=0,
            grid=grid,
            in_specs=[
                pl.BlockSpec((batch_block, S, S), lambda b: (b, 0, 0)),
            ],
            out_specs=pl.BlockSpec((batch_block, S, S), lambda b: (b, 0, 0)),
        ),
        compiler_params=pltpu.CompilerParams(
            dimension_semantics=("parallel",),
        ),
    )(logits.astype(jnp.float32))


def _reference(logits, temperature=1.0, iterations=5):
    la = logits.astype(jnp.float32)
    for _ in range(iterations):
        la = la - jax.nn.logsumexp(la, axis=2, keepdims=True)
        la = la - jax.nn.logsumexp(la, axis=1, keepdims=True)
    return jnp.exp(la / temperature)


if __name__ == "__main__":
    B, S = 8, 16  # batch, seq_len (small, consistent with the module's forward)
    TEMPERATURE = 1.0
    ITERATIONS = 5

    key = jax.random.PRNGKey(0)
    logits = jax.random.normal(key, (B, S, S), dtype=jnp.float32)

    out = sinkhorn_normalize(logits, temperature=TEMPERATURE, iterations=ITERATIONS)
    out = jax.block_until_ready(out)

    ref = jax.block_until_ready(_reference(logits, TEMPERATURE, ITERATIONS))
    assert out.shape == (B, S, S)
    assert jnp.allclose(out, ref, atol=1e-5, rtol=1e-5), "mismatch vs JAX reference"

    # Sanity: the final Sinkhorn step is a column (dim=1) normalization, so
    # column sums should be ~1 at temperature=1.0.
    col_sums = jnp.sum(out, axis=1)
    assert jnp.allclose(col_sums, jnp.ones_like(col_sums), atol=1e-3)

    print("KERNEL_OK")
</pallas_src>

<mosaic_0001>
module attributes {stable_mosaic.version = 11 : i64} {
  func.func @_sinkhorn_kernel(%arg0: i32, %arg1: memref<4x16x16xf32, #tpu.memory_space<vmem>>, %arg2: memref<4x16x16xf32, #tpu.memory_space<vmem>>) attributes {dimension_semantics = [#tpu.dimension_semantics<parallel>], iteration_bounds = array<i64: 2>, scalar_prefetch = 0 : i64, scratch_operands = 0 : i64, tpu.core_type = #tpu.core_type<tc>, window_params = [{transform_indices = @transform_0, window_bounds = array<i64: 4, 16, 16>}, {transform_indices = @transform_1, window_bounds = array<i64: 4, 16, 16>}]} {
    %c0 = arith.constant 0 : index
    %c0_0 = arith.constant 0 : index
    %c0_1 = arith.constant 0 : index
    %0 = vector.load %arg1[%c0, %c0_0, %c0_1] : memref<4x16x16xf32, #tpu.memory_space<vmem>>, vector<4x16x16xf32>
    %cst = arith.constant dense<0xFF800000> : vector<4x16xf32>
    %1 = vector.multi_reduction <maximumf>, %0, %cst [2] : vector<4x16x16xf32> to vector<4x16xf32>
    %2 = vector.shape_cast %1 : vector<4x16xf32> to vector<4x16x1xf32>
    %3 = vector.broadcast %2 : vector<4x16x1xf32> to vector<4x16x16xf32>
    %4 = arith.subf %0, %3 : vector<4x16x16xf32>
    %5 = math.exp %4 : vector<4x16x16xf32>
    %cst_2 = arith.constant dense<0.000000e+00> : vector<4x16xf32>
    %6 = vector.multi_reduction <add>, %5, %cst_2 [2] : vector<4x16x16xf32> to vector<4x16xf32>
    %7 = vector.shape_cast %6 : vector<4x16xf32> to vector<4x16x1xf32>
    %8 = math.log %7 : vector<4x16x1xf32>
    %9 = arith.addf %2, %8 : vector<4x16x1xf32>
    %10 = vector.broadcast %9 : vector<4x16x1xf32> to vector<4x16x16xf32>
    %11 = arith.subf %0, %10 : vector<4x16x16xf32>
    %cst_3 = arith.constant dense<0xFF800000> : vector<4x16xf32>
    %12 = vector.multi_reduction <maximumf>, %11, %cst_3 [1] : vector<4x16x16xf32> to vector<4x16xf32>
    %13 = vector.shape_cast %12 : vector<4x16xf32> to vector<4x1x16xf32>
    %14 = vector.broadcast %13 : vector<4x1x16xf32> to vector<4x16x16xf32>
    %15 = arith.subf %11, %14 : vector<4x16x16xf32>
    %16 = math.exp %15 : vector<4x16x16xf32>
    %cst_4 = arith.constant dense<0.000000e+00> : vector<4x16xf32>
    %17 = vector.multi_reduction <add>, %16, %cst_4 [1] : vector<4x16x16xf32> to vector<4x16xf32>
    %18 = vector.shape_cast %17 : vector<4x16xf32> to vector<4x1x16xf32>
    %19 = math.log %18 : vector<4x1x16xf32>
    %20 = arith.addf %13, %19 : vector<4x1x16xf32>
    %21 = vector.broadcast %20 : vector<4x1x16xf32> to vector<4x16x16xf32>
    %22 = arith.subf %11, %21 : vector<4x16x16xf32>
    %cst_5 = arith.constant dense<0xFF800000> : vector<4x16xf32>
    %23 = vector.multi_reduction <maximumf>, %22, %cst_5 [2] : vector<4x16x16xf32> to vector<4x16xf32>
    %24 = vector.shape_cast %23 : vector<4x16xf32> to vector<4x16x1xf32>
    %25 = vector.broadcast %24 : vector<4x16x1xf32> to vector<4x16x16xf32>
    %26 = arith.subf %22, %25 : vector<4x16x16xf32>
    %27 = math.exp %26 : vector<4x16x16xf32>
    %cst_6 = arith.constant dense<0.000000e+00> : vector<4x16xf32>
    %28 = vector.multi_reduction <add>, %27, %cst_6 [2] : vector<4x16x16xf32> to vector<4x16xf32>
    %29 = vector.shape_cast %28 : vector<4x16xf32> to vector<4x16x1xf32>
    %30 = math.log %29 : vector<4x16x1xf32>
    %31 = arith.addf %24, %30 : vector<4x16x1xf32>
    %32 = vector.broadcast %31 : vector<4x16x1xf32> to vector<4x16x16xf32>
    %33 = arith.subf %22, %32 : vector<4x16x16xf32>
    %cst_7 = arith.constant dense<0xFF800000> : vector<4x16xf32>
    %34 = vector.multi_reduction <maximumf>, %33, %cst_7 [1] : vector<4x16x16xf32> to vector<4x16xf32>
    %35 = vector.shape_cast %34 : vector<4x16xf32> to vector<4x1x16xf32>
    %36 = vector.broadcast %35 : vector<4x1x16xf32> to vector<4x16x16xf32>
    %37 = arith.subf %33, %36 : vector<4x16x16xf32>
    %38 = math.exp %37 : vector<4x16x16xf32>
    %cst_8 = arith.constant dense<0.000000e+00> : vector<4x16xf32>
    %39 = vector.multi_reduction <add>, %38, %cst_8 [1] : vector<4x16x16xf32> to vector<4x16xf32>
    %40 = vector.shape_cast %39 : vector<4x16xf32> to vector<4x1x16xf32>
    %41 = math.log %40 : vector<4x1x16xf32>
    %42 = arith.addf %35, %41 : vector<4x1x16xf32>
    %43 = vector.broadcast %42 : vector<4x1x16xf32> to vector<4x16x16xf32>
    %44 = arith.subf %33, %43 : vector<4x16x16xf32>
    %cst_9 = arith.constant dense<0xFF800000> : vector<4x16xf32>
    %45 = vector.multi_reduction <maximumf>, %44, %cst_9 [2] : vector<4x16x16xf32> to vector<4x16xf32>
    %46 = vector.shape_cast %45 : vector<4x16xf32> to vector<4x16x1xf32>
    %47 = vector.broadcast %46 : vector<4x16x1xf32> to vector<4x16x16xf32>
    %48 = arith.subf %44, %47 : vector<4x16x16xf32>
    %49 = math.exp %48 : vector<4x16x16xf32>
    %cst_10 = arith.constant dense<0.000000e+00> : vector<4x16xf32>
    %50 = vector.multi_reduction <add>, %49, %cst_10 [2] : vector<4x16x16xf32> to vector<4x16xf32>
    %51 = vector.shape_cast %50 : vector<4x16xf32> to vector<4x16x1xf32>
    %52 = math.log %51 : vector<4x16x1xf32>
    %53 = arith.addf %46, %52 : vector<4x16x1xf32>
    %54 = vector.broadcast %53 : vector<4x16x1xf32> to vector<4x16x16xf32>
    %55 = arith.subf %44, %54 : vector<4x16x16xf32>
    %cst_11 = arith.constant dense<0xFF800000> : vector<4x16xf32>
    %56 = vector.multi_reduction <maximumf>, %55, %cst_11 [1] : vector<4x16x16xf32> to vector<4x16xf32>
    %57 = vector.shape_cast %56 : vector<4x16xf32> to vector<4x1x16xf32>
    %58 = vector.broadcast %57 : vector<4x1x16xf32> to vector<4x16x16xf32>
    %59 = arith.subf %55, %58 : vector<4x16x16xf32>
    %60 = math.exp %59 : vector<4x16x16xf32>
    %cst_12 = arith.constant dense<0.000000e+00> : vector<4x16xf32>
    %61 = vector.multi_reduction <add>, %60, %cst_12 [1] : vector<4x16x16xf32> to vector<4x16xf32>
    %62 = vector.shape_cast %61 : vector<4x16xf32> to vector<4x1x16xf32>
    %63 = math.log %62 : vector<4x1x16xf32>
    %64 = arith.addf %57, %63 : vector<4x1x16xf32>
    %65 = vector.broadcast %64 : vector<4x1x16xf32> to vector<4x16x16xf32>
    %66 = arith.subf %55, %65 : vector<4x16x16xf32>
    %cst_13 = arith.constant dense<0xFF800000> : vector<4x16xf32>
    %67 = vector.multi_reduction <maximumf>, %66, %cst_13 [2] : vector<4x16x16xf32> to vector<4x16xf32>
    %68 = vector.shape_cast %67 : vector<4x16xf32> to vector<4x16x1xf32>
    %69 = vector.broadcast %68 : vector<4x16x1xf32> to vector<4x16x16xf32>
    %70 = arith.subf %66, %69 : vector<4x16x16xf32>
    %71 = math.exp %70 : vector<4x16x16xf32>
    %cst_14 = arith.constant dense<0.000000e+00> : vector<4x16xf32>
    %72 = vector.multi_reduction <add>, %71, %cst_14 [2] : vector<4x16x16xf32> to vector<4x16xf32>
    %73 = vector.shape_cast %72 : vector<4x16xf32> to vector<4x16x1xf32>
    %74 = math.log %73 : vector<4x16x1xf32>
    %75 = arith.addf %68, %74 : vector<4x16x1xf32>
    %76 = vector.broadcast %75 : vector<4x16x1xf32> to vector<4x16x16xf32>
    %77 = arith.subf %66, %76 : vector<4x16x16xf32>
    %cst_15 = arith.constant dense<0xFF800000> : vector<4x16xf32>
    %78 = vector.multi_reduction <maximumf>, %77, %cst_15 [1] : vector<4x16x16xf32> to vector<4x16xf32>
    %79 = vector.shape_cast %78 : vector<4x16xf32> to vector<4x1x16xf32>
    %80 = vector.broadcast %79 : vector<4x1x16xf32> to vector<4x16x16xf32>
    %81 = arith.subf %77, %80 : vector<4x16x16xf32>
    %82 = math.exp %81 : vector<4x16x16xf32>
    %cst_16 = arith.constant dense<0.000000e+00> : vector<4x16xf32>
    %83 = vector.multi_reduction <add>, %82, %cst_16 [1] : vector<4x16x16xf32> to vector<4x16xf32>
    %84 = vector.shape_cast %83 : vector<4x16xf32> to vector<4x1x16xf32>
    %85 = math.log %84 : vector<4x1x16xf32>
    %86 = arith.addf %79, %85 : vector<4x1x16xf32>
    %87 = vector.broadcast %86 : vector<4x1x16xf32> to vector<4x16x16xf32>
    %88 = arith.subf %77, %87 : vector<4x16x16xf32>
    %cst_17 = arith.constant dense<0xFF800000> : vector<4x16xf32>
    %89 = vector.multi_reduction <maximumf>, %88, %cst_17 [2] : vector<4x16x16xf32> to vector<4x16xf32>
    %90 = vector.shape_cast %89 : vector<4x16xf32> to vector<4x16x1xf32>
    %91 = vector.broadcast %90 : vector<4x16x1xf32> to vector<4x16x16xf32>
    %92 = arith.subf %88, %91 : vector<4x16x16xf32>
    %93 = math.exp %92 : vector<4x16x16xf32>
    %cst_18 = arith.constant dense<0.000000e+00> : vector<4x16xf32>
    %94 = vector.multi_reduction <add>, %93, %cst_18 [2] : vector<4x16x16xf32> to vector<4x16xf32>
    %95 = vector.shape_cast %94 : vector<4x16xf32> to vector<4x16x1xf32>
    %96 = math.log %95 : vector<4x16x1xf32>
    %97 = arith.addf %90, %96 : vector<4x16x1xf32>
    %98 = vector.broadcast %97 : vector<4x16x1xf32> to vector<4x16x16xf32>
    %99 = arith.subf %88, %98 : vector<4x16x16xf32>
    %cst_19 = arith.constant dense<0xFF800000> : vector<4x16xf32>
    %100 = vector.multi_reduction <maximumf>, %99, %cst_19 [1] : vector<4x16x16xf32> to vector<4x16xf32>
    %101 = vector.shape_cast %100 : vector<4x16xf32> to vector<4x1x16xf32>
    %102 = vector.broadcast %101 : vector<4x1x16xf32> to vector<4x16x16xf32>
    %103 = arith.subf %99, %102 : vector<4x16x16xf32>
    %104 = math.exp %103 : vector<4x16x16xf32>
    %cst_20 = arith.constant dense<0.000000e+00> : vector<4x16xf32>
    %105 = vector.multi_reduction <add>, %104, %cst_20 [1] : vector<4x16x16xf32> to vector<4x16xf32>
    %106 = vector.shape_cast %105 : vector<4x16xf32> to vector<4x1x16xf32>
    %107 = math.log %106 : vector<4x1x16xf32>
    %108 = arith.addf %101, %107 : vector<4x1x16xf32>
    %109 = vector.broadcast %108 : vector<4x1x16xf32> to vector<4x16x16xf32>
    %110 = arith.subf %99, %109 : vector<4x16x16xf32>
    %111 = math.exp %110 : vector<4x16x16xf32>
    %c0_21 = arith.constant 0 : index
    %c0_22 = arith.constant 0 : index
    %c0_23 = arith.constant 0 : index
    %112 = vector.load %arg2[%c0_21, %c0_22, %c0_23] : memref<4x16x16xf32, #tpu.memory_space<vmem>>, vector<4x16x16xf32>
    tpu.vector_store %arg2[%c0_21, %c0_22, %c0_23], %111 {strides = array<i32>} : memref<4x16x16xf32, #tpu.memory_space<vmem>>, vector<4x16x16xf32>,
    return
  }
  func.func @transform_0(%arg0: i32) -> (i32, i32, i32) {
    %c0_i32 = arith.constant 0 : i32
    %c0_i32_0 = arith.constant 0 : i32
    %c0_i32_1 = arith.constant 0 : i32
    return %arg0, %c0_i32, %c0_i32_0 : i32, i32, i32
  }
  func.func @transform_1(%arg0: i32) -> (i32, i32, i32) {
    %c0_i32 = arith.constant 0 : i32
    %c0_i32_0 = arith.constant 0 : i32
    %c0_i32_1 = arith.constant 0 : i32
    return %arg0, %c0_i32, %c0_i32_0 : i32, i32, i32
  }
}

</mosaic_0001>

<llo_original>
// kernel: tpu_custom_call.1
$region0: #{tpu_custom_call.1}
  #allocation0 [shape = 'u32[]', space=smem, size = 0x4, offset = 0x4, fixed_abs, tag = 'smem constant byte address 0x4 - core index']
  #allocation1 [shape = 'u32[144,128]{1,0:T(1,128)}', space=vmem, size = 0x12000, scoped, tag = 'internal scratch']
  %s0 = inlined_call_operand.hbm [shape: f32[8,16,16], index: 0, kind: input, shape index: {}]
  %s1 = inlined_call_operand.hbm [shape: f32[8,16,16], index: 1, kind: output, shape index: {}]
  %s2 = sld [smem:[#allocation0]]
  $region41: #{tpu_custom_call.1} parent=0
    _
  %s4 = ssub.s32 1, %s2
  %s5 = scalar_select 0, %s4, %s2
  $region1: #{tpu_custom_call.1} parent=0
    #allocation2 [shape = 'u8[65536]{0}', space=vmem, size = 0x10000, scoped, tag = 'input window, operand 0']
    #allocation3 [shape = 's32[2]{0}', space=sflag, size = 0x8, scoped, tag = 'scoped memory for tpu_custom_call.1']
    #allocation4 [shape = 's32[2]{0}', space=sflag, size = 0x8, scoped, tag = 'scoped memory for tpu_custom_call.1']
    #allocation5 [shape = 'u8[65536]{0}', space=vmem, size = 0x10000, scoped, tag = 'output window, operand 0']
    %6 = vsyncpa [#allocation3], 0
    %s7 = scalar_lea.sflag [#allocation3], 1
    %8 = vsyncpa %s7, 0
    %9 = vsyncpa [#allocation4], 0
    %s10 = scalar_lea.sflag [#allocation4], 1
    %11 = vsyncpa %s10, 0
    loop: start=0, step=1, limit=4
    $region2: #{tpu_custom_call.1} parent=1 // loop_pre_header
      _
    $region3: #{tpu_custom_call.1} parent=1 // loop_header
      %s13 = sphi 0, %s17
      %p14 = scmp.ge.s32.totalorder %s13, 4
      %s23 = sphi 0, %s25
      %s26 = sphi 0, %s23
      %s27 = sphi 0, %s26
      %s43 = sphi 0, %s27
      %s49 = sphi 0, %s51
      %s52 = sphi 0, %s49
      %s53 = sphi 0, %s52
      %s69 = sphi 0, %s53
    $region4: #{tpu_custom_call.1} parent=1 // loop_header_branch
      %16 = sbr.rel (%p14) target = $region8
    $region5: #{tpu_custom_call.1} parent=1 // loop_body
      %s18 = ssub.s32 %s13, 1
      %s19 = ssub.s32 %s13, 2
      %s20 = sadd.s32 %s13, 1
      %s21 = ssub.s32 %s13, %s20
      %p22 = scmp.eq.s32.totalorder %s21, 0
      %s24 = sadd.s32 %s23, 1
      %s25 = scalar_select %p22, %s23, %s24
      %p28 = pneg %p22
      %p29 = scmp.eq.s32.totalorder %s13, 1
      %p30 = por %p28, %p29
      %p31 = scmp.ne.s32.totalorder %s23, %s26
      %p32 = scmp.eq.s32.totalorder %s13, 0
      %p33 = por %p31, %p32
      %p34 = scmp.ne.s32.totalorder %s23, %s26
      %p35 = scmp.eq.s32.totalorder %s18, 1
      %p36 = por %p34, %p35
      %p37 = scmp.ne.s32.totalorder %s26, %s27
      %p38 = scmp.eq.s32.totalorder %s18, 0
      %p39 = por %p37, %p38
      %p40 = scmp.ne.s32.totalorder %s26, %s27
      %p41 = scmp.eq.s32.totalorder %s19, 1
      %p42 = por %p40, %p41
      %p44 = scmp.ne.s32.totalorder %s27, %s43
      %p45 = scmp.eq.s32.totalorder %s19, 0
      %p46 = por %p44, %p45
      %s47 = ssub.s32 %s13, %s20
      %p48 = scmp.eq.s32.totalorder %s47, 0
      %s50 = sadd.s32 %s49, 1
      %s51 = scalar_select %p48, %s49, %s50
      %p54 = pneg %p48
      %p55 = scmp.eq.s32.totalorder %s13, 1
      %p56 = por %p54, %p55
      %p57 = scmp.ne.s32.totalorder %s49, %s52
      %p58 = scmp.eq.s32.totalorder %s13, 0
      %p59 = por %p57, %p58
      %p60 = scmp.ne.s32.totalorder %s49, %s52
      %p61 = scmp.eq.s32.totalorder %s18, 1
      %p62 = por %p60, %p61
      %p63 = scmp.ne.s32.totalorder %s52, %s53
      %p64 = scmp.eq.s32.totalorder %s18, 0
      %p65 = por %p63, %p64
      %p66 = scmp.ne.s32.totalorder %s52, %s53
      %p67 = scmp.eq.s32.totalorder %s19, 1
      %p68 = por %p66, %p67
      %p70 = scmp.ne.s32.totalorder %s53, %s69
      %p71 = scmp.eq.s32.totalorder %s19, 0
      %p72 = por %p70, %p71
      %p73 = scmp.le.s32.totalorder 1, %s13
      %p74 = scmp.lt.s32.totalorder %s13, 3
      %p75 = pnand %p73, %p74
      %p76 = pneg %p75
      // Predicated region
      $region9: #{tpu_custom_call.1} parent=5 // pred_check
        _
      $region10: #{tpu_custom_call.1} parent=5 // pred_check_branch
        %78 = sbr.rel (%p75) target = $region12
      $region11: #{tpu_custom_call.1} parent=5 // pred_region
        %s79 = ssub.s32 %s13, 1
      $region12: #{tpu_custom_call.1} parent=5 // pred_fallthru
        _
      %p80 = scmp.lt.s32.totalorder %s13, 2
      // Predicated region
      $region13: #{tpu_custom_call.1} parent=5 // pred_check
        %p81 = pneg %p80
      $region14: #{tpu_custom_call.1} parent=5 // pred_check_branch
        %83 = sbr.rel (%p81) target = $region16
      $region15: #{tpu_custom_call.1} parent=5 // pred_region
        // Predicated region
        $region17: #{tpu_custom_call.1} parent=15 // pred_check
          %p84 = pneg %p33
        $region18: #{tpu_custom_call.1} parent=15 // pred_check_branch
          %86 = sbr.rel (%p84) target = $region20
        $region19: #{tpu_custom_call.1} parent=15 // pred_region
          %s87 = sand.u32 %s23, 1
          %s88 = scalar_lea.sflag [#allocation3], %s87
          %s89 = sand.u32 %s23, 1
          %s90 = smul.addr %s89, 64
          %s91 = scalar_lea.vmem [#allocation2], %s90
          %s92 = smul.u32 4, %s13
          %s94 = ssub.s32 1024, 1024
          %95 = vsyncadd %s88, %s94
          %s96 = smul.addr %s92, 2
          %s97 = smul.addr %s96, 128
          %s98 = scalar_lea.hbm %s0, %s97
          %s99 = sshll.u32 %s91, 4
          %s100 = int_to_ptr.vmem [resolvable:$true] %s99
          %105 = dma.hbm_to_vmem [thread:$0]  %s98, 1024, %s100, %s88, 128, 128, 8
        $region20: #{tpu_custom_call.1} parent=15 // pred_fallthru
          _
      $region16: #{tpu_custom_call.1} parent=5 // pred_fallthru
        _
      %p106 = scmp.le.s32.totalorder 1, %s13
      %p107 = scmp.lt.s32.totalorder %s13, 3
      %p108 = pnand %p106, %p107
      %p109 = pneg %p108
      // Predicated region
      $region21: #{tpu_custom_call.1} parent=5 // pred_check
        _
      $region22: #{tpu_custom_call.1} parent=5 // pred_check_branch
        %111 = sbr.rel (%p108) target = $region24
      $region23: #{tpu_custom_call.1} parent=5 // pred_region
        %s112 = ssub.s32 %s13, 1
        %s113 = sand.u32 %s26, 1
        %s114 = scalar_lea.sflag [#allocation3], %s113
        %s115 = sand.u32 %s26, 1
        %s116 = smul.addr %s115, 64
        %s117 = scalar_lea.vmem [#allocation2], %s116
        // Predicated region
        $region25: #{tpu_custom_call.1} parent=23 // pred_check
          %p118 = pneg %p39
        $region26: #{tpu_custom_call.1} parent=23 // pred_check_branch
          %120 = sbr.rel (%p118) target = $region28
        $region27: #{tpu_custom_call.1} parent=23 // pred_region
          %121 = dma.done %s114, 1024
        $region28: #{tpu_custom_call.1} parent=23 // pred_fallthru
          _
        %s122 = sand.u32 %s26, 1
        %s123 = scalar_lea.sflag [#allocation3], %s122
        %s124 = sand.u32 %s26, 1
        %s125 = smul.addr %s124, 64
        %s126 = scalar_lea.vmem [#allocation2], %s125
        %p127 = pneg %p39
        %p128 = pneg %p36
        %p129 = pneg %p65
        %p130 = pneg %p62
        %s131 = sand.u32 %s52, 1
        %s132 = scalar_lea.sflag [#allocation4], %s131
        %s133 = sand.u32 %s52, 1
        %s134 = smul.addr %s133, 64
        %s135 = scalar_lea.vmem [#allocation5], %s134
        %s136 = smul.u32 4, %s18
        %s137 = smul.u32 4, %s18
        %v138 = vld [vmem:[%s117] sm:$0xff]
        %v139 = vld [vmem:[%s117 + $0x8] sm:$0xff]
        %v140 = vld [vmem:[%s117 + $0x10] sm:$0xff]
        %v141 = vld [vmem:[%s117 + $0x18] sm:$0xff]
        %v142 = vld [vmem:[%s117 + $0x20] sm:$0xff]
        %v143 = vld [vmem:[%s117 + $0x28] sm:$0xff]
        %v144 = vld [vmem:[%s117 + $0x30] sm:$0xff]
        %v145 = vld [vmem:[%s117 + $0x38] sm:$0xff]
        %vm146 = vcmask 130048
        %v147 = vsel %vm146, %v138, -inf
        %148 = vmax.xlane.f32.xlu0 %v147
        %v149 = vpop.xlane.xlu0 %148
        %v150 = vsel %vm146, %v139, -inf
        %151 = vmax.xlane.f32.xlu0 %v150
        %v152 = vpop.xlane.xlu0 %151
        %v153 = vsel %vm146, %v140, -inf
        %154 = vmax.xlane.f32.xlu0 %v153
        %v155 = vpop.xlane.xlu0 %154
        %v156 = vsel %vm146, %v141, -inf
        %157 = vmax.xlane.f32.xlu0 %v156
        %v158 = vpop.xlane.xlu0 %157
        %v159 = vsel %vm146, %v142, -inf
        %160 = vmax.xlane.f32.xlu0 %v159
        %v161 = vpop.xlane.xlu0 %160
        %v162 = vsel %vm146, %v143, -inf
        %163 = vmax.xlane.f32.xlu0 %v162
        %v164 = vpop.xlane.xlu0 %163
        %v165 = vsel %vm146, %v144, -inf
        %166 = vmax.xlane.f32.xlu0 %v165
        %v167 = vpop.xlane.xlu0 %166
        %v168 = vsel %vm146, %v145, -inf
        %169 = vmax.xlane.f32.xlu0 %v168
        %v170 = vpop.xlane.xlu0 %169
        %v171 = vsub.f32 %v138, %v149
        %v172 = vsub.f32 %v139, %v152
        %v173 = vsub.f32 %v140, %v155
        %v174 = vsub.f32 %v141, %v158
        %v175 = vsub.f32 %v142, %v161
        %v176 = vsub.f32 %v143, %v164
        %v177 = vsub.f32 %v144, %v167
        %v178 = vsub.f32 %v145, %v170
        %v179 = vmul.f32 %v171, 1.442695
        %v180 = vpow.pop %v179
        %v181 = vmul.f32 %v172, 1.442695
        %v182 = vpow.pop %v181
        %v183 = vmul.f32 %v173, 1.442695
        %v184 = vpow.pop %v183
        %v185 = vmul.f32 %v174, 1.442695
        %v186 = vpow.pop %v185
        %v187 = vmul.f32 %v175, 1.442695
        %v188 = vpow.pop %v187
        %v189 = vmul.f32 %v176, 1.442695
        %v190 = vpow.pop %v189
        %v191 = vmul.f32 %v177, 1.442695
        %v192 = vpow.pop %v191
        %v193 = vmul.f32 %v178, 1.442695
        %v194 = vpow.pop %v193
        %v195 = vsel %vm146, %v180, 0.0
        %196 = vadd.xlane.f32.xlu0 %v195
        %v197 = vpop.xlane.xlu0 %196
        %v198 = vsel %vm146, %v182, 0.0
        %199 = vadd.xlane.f32.xlu0 %v198
        %v200 = vpop.xlane.xlu0 %199
        %v201 = vsel %vm146, %v184, 0.0
        %202 = vadd.xlane.f32.xlu0 %v201
        %v203 = vpop.xlane.xlu0 %202
        %v204 = vsel %vm146, %v186, 0.0
        %205 = vadd.xlane.f32.xlu0 %v204
        %v206 = vpop.xlane.xlu0 %205
        %v207 = vsel %vm146, %v188, 0.0
        %208 = vadd.xlane.f32.xlu0 %v207
        %v209 = vpop.xlane.xlu0 %208
        %v210 = vsel %vm146, %v190, 0.0
        %211 = vadd.xlane.f32.xlu0 %v210
        %v212 = vpop.xlane.xlu0 %211
        %v213 = vsel %vm146, %v192, 0.0
        %214 = vadd.xlane.f32.xlu0 %v213
        %v215 = vpop.xlane.xlu0 %214
        %v216 = vsel %vm146, %v194, 0.0
        %217 = vadd.xlane.f32.xlu0 %v216
        %v218 = vpop.xlane.xlu0 %217
        %v219 = vlog2.pop %v197
        %v220 = vmul.f32 %v219, 0.6931472
        %v221 = vlog2.pop %v200
        %v222 = vmul.f32 %v221, 0.6931472
        %v223 = vlog2.pop %v203
        %v224 = vmul.f32 %v223, 0.6931472
        %v225 = vlog2.pop %v206
        %v226 = vmul.f32 %v225, 0.6931472
        %v227 = vlog2.pop %v209
        %v228 = vmul.f32 %v227, 0.6931472
        %v229 = vlog2.pop %v212
        %v230 = vmul.f32 %v229, 0.6931472
        %v231 = vlog2.pop %v215
        %v232 = vmul.f32 %v231, 0.6931472
        %v233 = vlog2.pop %v218
        %v234 = vmul.f32 %v233, 0.6931472
        %v235 = vadd.f32 %v149, %v220
        %v236 = vadd.f32 %v152, %v222
        %v237 = vadd.f32 %v155, %v224
        %v238 = vadd.f32 %v158, %v226
        %v239 = vadd.f32 %v161, %v228
        %v240 = vadd.f32 %v164, %v230
        %v241 = vadd.f32 %v167, %v232
        %v242 = vadd.f32 %v170, %v234
        %v243 = vsub.f32 %v138, %v235
        %v244 = vsub.f32 %v139, %v236
        %v245 = vsub.f32 %v140, %v237
        %v246 = vsub.f32 %v141, %v238
        %v247 = vsub.f32 %v142, %v239
        %v248 = vsub.f32 %v143, %v240
        %v249 = vsub.f32 %v144, %v241
        %v250 = vsub.f32 %v145, %v242
        %v251 = vsel %vm146, %v243, -inf
        %v252 = vsel %vm146, %v244, -inf
        %v253 = vmax.f32 %v251, %v252
        %v254 = vrot.slane %v253, 4
        %v255 = vmax.f32 %v253, %v254
        %v256 = vrot.slane %v255, 2
        %v257 = vmax.f32 %v255, %v256
        %v258 = vrot.slane %v257, 1
        %v259 = vmax.f32 %v257, %v258
        %v260 = vsel %vm146, %v245, -inf
        %v261 = vsel %vm146, %v246, -inf
        %v262 = vmax.f32 %v260, %v261
        %v263 = vrot.slane %v262, 4
        %v264 = vmax.f32 %v262, %v263
        %v265 = vrot.slane %v264, 2
        %v266 = vmax.f32 %v264, %v265
        %v267 = vrot.slane %v266, 1
        %v268 = vmax.f32 %v266, %v267
        %v269 = vsel %vm146, %v247, -inf
        %v270 = vsel %vm146, %v248, -inf
        %v271 = vmax.f32 %v269, %v270
        %v272 = vrot.slane %v271, 4
        %v273 = vmax.f32 %v271, %v272
        %v274 = vrot.slane %v273, 2
        %v275 = vmax.f32 %v273, %v274
        %v276 = vrot.slane %v275, 1
        %v277 = vmax.f32 %v275, %v276
        %v278 = vsel %vm146, %v249, -inf
        %v279 = vsel %vm146, %v250, -inf
        %v280 = vmax.f32 %v278, %v279
        %v281 = vrot.slane %v280, 4
        %v282 = vmax.f32 %v280, %v281
        %v283 = vrot.slane %v282, 2
        %v284 = vmax.f32 %v282, %v283
        %v285 = vrot.slane %v284, 1
        %v286 = vmax.f32 %v284, %v285
        %v287 = vsub.f32 %v243, %v259
        %v288 = vsub.f32 %v244, %v259
        %v289 = vsub.f32 %v245, %v268
        %v290 = vsub.f32 %v246, %v268
        %v291 = vsub.f32 %v247, %v277
        %v292 = vsub.f32 %v248, %v277
        %v293 = vsub.f32 %v249, %v286
        %v294 = vsub.f32 %v250, %v286
        %v295 = vmul.f32 %v287, 1.442695
        %v296 = vpow.pop %v295
        %v297 = vmul.f32 %v288, 1.442695
        %v298 = vpow.pop %v297
        %v299 = vmul.f32 %v289, 1.442695
        %v300 = vpow.pop %v299
        %v301 = vmul.f32 %v290, 1.442695
        %v302 = vpow.pop %v301
        %v303 = vmul.f32 %v291, 1.442695
        %v304 = vpow.pop %v303
        %v305 = vmul.f32 %v292, 1.442695
        %v306 = vpow.pop %v305
        %v307 = vmul.f32 %v293, 1.442695
        %v308 = vpow.pop %v307
        %v309 = vmul.f32 %v294, 1.442695
        %v310 = vpow.pop %v309
        %v311 = vsel %vm146, %v296, 0.0
        %v312 = vsel %vm146, %v298, 0.0
        %v313 = vadd.f32 %v311, %v312
        %v314 = vrot.slane %v313, 4
        %v315 = vadd.f32 %v313, %v314
        %v316 = vrot.slane %v315, 2
        %v317 = vadd.f32 %v315, %v316
        %v318 = vrot.slane %v317, 1
        %v319 = vadd.f32 %v317, %v318
        %v320 = vsel %vm146, %v300, 0.0
        %v321 = vsel %vm146, %v302, 0.0
        %v322 = vadd.f32 %v320, %v321
        %v323 = vrot.slane %v322, 4
        %v324 = vadd.f32 %v322, %v323
        %v325 = vrot.slane %v324, 2
        %v326 = vadd.f32 %v324, %v325
        %v327 = vrot.slane %v326, 1
        %v328 = vadd.f32 %v326, %v327
        %v329 = vsel %vm146, %v304, 0.0
        %v330 = vsel %vm146, %v306, 0.0
        %v331 = vadd.f32 %v329, %v330
        %v332 = vrot.slane %v331, 4
        %v333 = vadd.f32 %v331, %v332
        %v334 = vrot.slane %v333, 2
        %v335 = vadd.f32 %v333, %v334
        %v336 = vrot.slane %v335, 1
        %v337 = vadd.f32 %v335, %v336
        %v338 = vsel %vm146, %v308, 0.0
        %v339 = vsel %vm146, %v310, 0.0
        %v340 = vadd.f32 %v338, %v339
        %v341 = vrot.slane %v340, 4
        %v342 = vadd.f32 %v340, %v341
        %v343 = vrot.slane %v342, 2
        %v344 = vadd.f32 %v342, %v343
        %v345 = vrot.slane %v344, 1
        %v346 = vadd.f32 %v344, %v345
        %v347 = vlog2.pop %v319
        %v348 = vmul.f32 %v347, 0.6931472
        %v349 = vlog2.pop %v328
        %v350 = vmul.f32 %v349, 0.6931472
        %v351 = vlog2.pop %v337
        %v352 = vmul.f32 %v351, 0.6931472
        %v353 = vlog2.pop %v346
        %v354 = vmul.f32 %v353, 0.6931472
        %v355 = vadd.f32 %v259, %v348
        %v356 = vadd.f32 %v268, %v350
        %v357 = vadd.f32 %v277, %v352
        %v358 = vadd.f32 %v286, %v354
        %v359 = vsub.f32 %v243, %v355
        %v360 = vsub.f32 %v244, %v355
        %v361 = vsub.f32 %v245, %v356
        %v362 = vsub.f32 %v246, %v356
        %v363 = vsub.f32 %v247, %v357
        %v364 = vsub.f32 %v248, %v357
        %v365 = vsub.f32 %v249, %v358
        %v366 = vsub.f32 %v250, %v358
        %v367 = vsel %vm146, %v359, -inf
        %368 = vmax.xlane.f32.xlu0 %v367
        %v369 = vpop.xlane.xlu0 %368
        %v370 = vsel %vm146, %v360, -inf
        %371 = vmax.xlane.f32.xlu0 %v370
        %v372 = vpop.xlane.xlu0 %371
        %v373 = vsel %vm146, %v361, -inf
        %374 = vmax.xlane.f32.xlu0 %v373
        %v375 = vpop.xlane.xlu0 %374
        %v376 = vsel %vm146, %v362, -inf
        %377 = vmax.xlane.f32.xlu0 %v376
        %v378 = vpop.xlane.xlu0 %377
        %v379 = vsel %vm146, %v363, -inf
        %380 = vmax.xlane.f32.xlu0 %v379
        %v381 = vpop.xlane.xlu0 %380
        %v382 = vsel %vm146, %v364, -inf
        %383 = vmax.xlane.f32.xlu0 %v382
        %v384 = vpop.xlane.xlu0 %383
        %v385 = vsel %vm146, %v365, -inf
        %386 = vmax.xlane.f32.xlu0 %v385
        %v387 = vpop.xlane.xlu0 %386
        %v388 = vsel %vm146, %v366, -inf
        %389 = vmax.xlane.f32.xlu0 %v388
        %v390 = vpop.xlane.xlu0 %389
        %v391 = vsub.f32 %v359, %v369
        %v392 = vsub.f32 %v360, %v372
        %v393 = vsub.f32 %v361, %v375
        %v394 = vsub.f32 %v362, %v378
        %v395 = vsub.f32 %v363, %v381
        %v396 = vsub.f32 %v364, %v384
        %v397 = vsub.f32 %v365, %v387
        %v398 = vsub.f32 %v366, %v390
        %v399 = vmul.f32 %v391, 1.442695
        %v400 = vpow.pop %v399
        %v401 = vmul.f32 %v392, 1.442695
        %v402 = vpow.pop %v401
        %v403 = vmul.f32 %v393, 1.442695
        %v404 = vpow.pop %v403
        %v405 = vmul.f32 %v394, 1.442695
        %v406 = vpow.pop %v405
        %v407 = vmul.f32 %v395, 1.442695
        %v408 = vpow.pop %v407
        %v409 = vmul.f32 %v396, 1.442695
        %v410 = vpow.pop %v409
        %v411 = vmul.f32 %v397, 1.442695
        %v412 = vpow.pop %v411
        %v413 = vmul.f32 %v398, 1.442695
        %v414 = vpow.pop %v413
        %v415 = vsel %vm146, %v400, 0.0
        %416 = vadd.xlane.f32.xlu0 %v415
        %v417 = vpop.xlane.xlu0 %416
        %v418 = vsel %vm146, %v402, 0.0
        %419 = vadd.xlane.f32.xlu0 %v418
        %v420 = vpop.xlane.xlu0 %419
        %v421 = vsel %vm146, %v404, 0.0
        %422 = vadd.xlane.f32.xlu0 %v421
        %v423 = vpop.xlane.xlu0 %422
        %v424 = vsel %vm146, %v406, 0.0
        %425 = vadd.xlane.f32.xlu0 %v424
        %v426 = vpop.xlane.xlu0 %425
        %v427 = vsel %vm146, %v408, 0.0
        %428 = vadd.xlane.f32.xlu0 %v427
        %v429 = vpop.xlane.xlu0 %428
        %v430 = vsel %vm146, %v410, 0.0
        %431 = vadd.xlane.f32.xlu0 %v430
        %v432 = vpop.xlane.xlu0 %431
        %v433 = vsel %vm146, %v412, 0.0
        %434 = vadd.xlane.f32.xlu0 %v433
        %v435 = vpop.xlane.xlu0 %434
        %v436 = vsel %vm146, %v414, 0.0
        %437 = vadd.xlane.f32.xlu0 %v436
        %v438 = vpop.xlane.xlu0 %437
        %v439 = vlog2.pop %v417
        %v440 = vmul.f32 %v439, 0.6931472
        %v441 = vlog2.pop %v420
        %v442 = vmul.f32 %v441, 0.6931472
        %v443 = vlog2.pop %v423
        %v444 = vmul.f32 %v443, 0.6931472
        %v445 = vlog2.pop %v426
        %v446 = vmul.f32 %v445, 0.6931472
        %v447 = vlog2.pop %v429
        %v448 = vmul.f32 %v447, 0.6931472
        %v449 = vlog2.pop %v432
        %v450 = vmul.f32 %v449, 0.6931472
        %v451 = vlog2.pop %v435
        %v452 = vmul.f32 %v451, 0.6931472
        %v453 = vlog2.pop %v438
        %v454 = vmul.f32 %v453, 0.6931472
        %v455 = vadd.f32 %v369, %v440
        %v456 = vadd.f32 %v372, %v442
        %v457 = vadd.f32 %v375, %v444
        %v458 = vadd.f32 %v378, %v446
        %v459 = vadd.f32 %v381, %v448
        %v460 = vadd.f32 %v384, %v450
        %v461 = vadd.f32 %v387, %v452
        %v462 = vadd.f32 %v390, %v454
        %v463 = vsub.f32 %v359, %v455
        %v464 = vsub.f32 %v360, %v456
        %v465 = vsub.f32 %v361, %v457
        %v466 = vsub.f32 %v362, %v458
        %v467 = vsub.f32 %v363, %v459
        %v468 = vsub.f32 %v364, %v460
        %v469 = vsub.f32 %v365, %v461
        %v470 = vsub.f32 %v366, %v462
        %v471 = vsel %vm146, %v463, -inf
        %v472 = vsel %vm146, %v464, -inf
        %v473 = vmax.f32 %v471, %v472
        %v474 = vrot.slane %v473, 4
        %v475 = vmax.f32 %v473, %v474
        %v476 = vrot.slane %v475, 2
        %v477 = vmax.f32 %v475, %v476
        %v478 = vrot.slane %v477, 1
        %v479 = vmax.f32 %v477, %v478
        %v480 = vsel %vm146, %v465, -inf
        %v481 = vsel %vm146, %v466, -inf
        %v482 = vmax.f32 %v480, %v481
        %v483 = vrot.slane %v482, 4
        %v484 = vmax.f32 %v482, %v483
        %v485 = vrot.slane %v484, 2
        %v486 = vmax.f32 %v484, %v485
        %v487 = vrot.slane %v486, 1
        %v488 = vmax.f32 %v486, %v487
        %v489 = vsel %vm146, %v467, -inf
        %v490 = vsel %vm146, %v468, -inf
        %v491 = vmax.f32 %v489, %v490
        %v492 = vrot.slane %v491, 4
        %v493 = vmax.f32 %v491, %v492
        %v494 = vrot.slane %v493, 2
        %v495 = vmax.f32 %v493, %v494
        %v496 = vrot.slane %v495, 1
        %v497 = vmax.f32 %v495, %v496
        %v498 = vsel %vm146, %v469, -inf
        %v499 = vsel %vm146, %v470, -inf
        %v500 = vmax.f32 %v498, %v499
        %v501 = vrot.slane %v500, 4
        %v502 = vmax.f32 %v500, %v501
        %v503 = vrot.slane %v502, 2
        %v504 = vmax.f32 %v502, %v503
        %v505 = vrot.slane %v504, 1
        %v506 = vmax.f32 %v504, %v505
        %v507 = vsub.f32 %v463, %v479
        %v508 = vsub.f32 %v464, %v479
        %v509 = vsub.f32 %v465, %v488
        %v510 = vsub.f32 %v466, %v488
        %v511 = vsub.f32 %v467, %v497
        %v512 = vsub.f32 %v468, %v497
        %v513 = vsub.f32 %v469, %v506
        %v514 = vsub.f32 %v470, %v506
        %v515 = vmul.f32 %v507, 1.442695
        %v516 = vpow.pop %v515
        %v517 = vmul.f32 %v508, 1.442695
        %v518 = vpow.pop %v517
        %v519 = vmul.f32 %v509, 1.442695
        %v520 = vpow.pop %v519
        %v521 = vmul.f32 %v510, 1.442695
        %v522 = vpow.pop %v521
        %v523 = vmul.f32 %v511, 1.442695
        %v524 = vpow.pop %v523
        %v525 = vmul.f32 %v512, 1.442695
        %v526 = vpow.pop %v525
        %v527 = vmul.f32 %v513, 1.442695
        %v528 = vpow.pop %v527
        %v529 = vmul.f32 %v514, 1.442695
        %v530 = vpow.pop %v529
        %v531 = vsel %vm146, %v516, 0.0
        %v532 = vsel %vm146, %v518, 0.0
        %v533 = vadd.f32 %v531, %v532
        %v534 = vrot.slane %v533, 4
        %v535 = vadd.f32 %v533, %v534
        %v536 = vrot.slane %v535, 2
        %v537 = vadd.f32 %v535, %v536
        %v538 = vrot.slane %v537, 1
        %v539 = vadd.f32 %v537, %v538
        %v540 = vsel %vm146, %v520, 0.0
        %v541 = vsel %vm146, %v522, 0.0
        %v542 = vadd.f32 %v540, %v541
        %v543 = vrot.slane %v542, 4
        %v544 = vadd.f32 %v542, %v543
        %v545 = vrot.slane %v544, 2
        %v546 = vadd.f32 %v544, %v545
        %v547 = vrot.slane %v546, 1
        %v548 = vadd.f32 %v546, %v547
        %v549 = vsel %vm146, %v524, 0.0
        %v550 = vsel %vm146, %v526, 0.0
        %v551 = vadd.f32 %v549, %v550
        %v552 = vrot.slane %v551, 4
        %v553 = vadd.f32 %v551, %v552
        %v554 = vrot.slane %v553, 2
        %v555 = vadd.f32 %v553, %v554
        %v556 = vrot.slane %v555, 1
        %v557 = vadd.f32 %v555, %v556
        %v558 = vsel %vm146, %v528, 0.0
        %v559 = vsel %vm146, %v530, 0.0
        %v560 = vadd.f32 %v558, %v559
        %v561 = vrot.slane %v560, 4
        %v562 = vadd.f32 %v560, %v561
        %v563 = vrot.slane %v562, 2
        %v564 = vadd.f32 %v562, %v563
        %v565 = vrot.slane %v564, 1
        %v566 = vadd.f32 %v564, %v565
        %v567 = vlog2.pop %v539
        %v568 = vmul.f32 %v567, 0.6931472
        %v569 = vlog2.pop %v548
        %v570 = vmul.f32 %v569, 0.6931472
        %v571 = vlog2.pop %v557
        %v572 = vmul.f32 %v571, 0.6931472
        %v573 = vlog2.pop %v566
        %v574 = vmul.f32 %v573, 0.6931472
        %v575 = vadd.f32 %v479, %v568
        %v576 = vadd.f32 %v488, %v570
        %v577 = vadd.f32 %v497, %v572
        %v578 = vadd.f32 %v506, %v574
        %v579 = vsub.f32 %v463, %v575
        %v580 = vsub.f32 %v464, %v575
        %v581 = vsub.f32 %v465, %v576
        %v582 = vsub.f32 %v466, %v576
        %v583 = vsub.f32 %v467, %v577
        %v584 = vsub.f32 %v468, %v577
        %v585 = vsub.f32 %v469, %v578
        %v586 = vsub.f32 %v470, %v578
        %v587 = vsel %vm146, %v579, -inf
        %588 = vmax.xlane.f32.xlu0 %v587
        %v589 = vpop.xlane.xlu0 %588
        %v590 = vsel %vm146, %v580, -inf
        %591 = vmax.xlane.f32.xlu0 %v590
        %v592 = vpop.xlane.xlu0 %591
        %v593 = vsel %vm146, %v581, -inf
        %594 = vmax.xlane.f32.xlu0 %v593
        %v595 = vpop.xlane.xlu0 %594
        %v596 = vsel %vm146, %v582, -inf
        %597 = vmax.xlane.f32.xlu0 %v596
        %v598 = vpop.xlane.xlu0 %597
        %v599 = vsel %vm146, %v583, -inf
        %600 = vmax.xlane.f32.xlu0 %v599
        %v601 = vpop.xlane.xlu0 %600
        %v602 = vsel %vm146, %v584, -inf
        %603 = vmax.xlane.f32.xlu0 %v602
        %v604 = vpop.xlane.xlu0 %603
        %v605 = vsel %vm146, %v585, -inf
        %606 = vmax.xlane.f32.xlu0 %v605
        %v607 = vpop.xlane.xlu0 %606
        %v608 = vsel %vm146, %v586, -inf
        %609 = vmax.xlane.f32.xlu0 %v608
        %v610 = vpop.xlane.xlu0 %609
        %v611 = vsub.f32 %v579, %v589
        %v612 = vsub.f32 %v580, %v592
        %v613 = vsub.f32 %v581, %v595
        %v614 = vsub.f32 %v582, %v598
        %v615 = vsub.f32 %v583, %v601
        %v616 = vsub.f32 %v584, %v604
        %v617 = vsub.f32 %v585, %v607
        %v618 = vsub.f32 %v586, %v610
        %v619 = vmul.f32 %v611, 1.442695
        %v620 = vpow.pop %v619
        %v621 = vmul.f32 %v612, 1.442695
        %v622 = vpow.pop %v621
        %v623 = vmul.f32 %v613, 1.442695
        %v624 = vpow.pop %v623
        %v625 = vmul.f32 %v614, 1.442695
        %v626 = vpow.pop %v625
        %v627 = vmul.f32 %v615, 1.442695
        %v628 = vpow.pop %v627
        %v629 = vmul.f32 %v616, 1.442695
        %v630 = vpow.pop %v629
        %v631 = vmul.f32 %v617, 1.442695
        %v632 = vpow.pop %v631
        %v633 = vmul.f32 %v618, 1.442695
        %v634 = vpow.pop %v633
        %v635 = vsel %vm146, %v620, 0.0
        %636 = vadd.xlane.f32.xlu0 %v635
        %v637 = vpop.xlane.xlu0 %636
        %v638 = vsel %vm146, %v622, 0.0
        %639 = vadd.xlane.f32.xlu0 %v638
        %v640 = vpop.xlane.xlu0 %639
        %v641 = vsel %vm146, %v624, 0.0
        %642 = vadd.xlane.f32.xlu0 %v641
        %v643 = vpop.xlane.xlu0 %642
        %v644 = vsel %vm146, %v626, 0.0
        %645 = vadd.xlane.f32.xlu0 %v644
        %v646 = vpop.xlane.xlu0 %645
        %v647 = vsel %vm146, %v628, 0.0
        %648 = vadd.xlane.f32.xlu0 %v647
        %v649 = vpop.xlane.xlu0 %648
        %v650 = vsel %vm146, %v630, 0.0
        %651 = vadd.xlane.f32.xlu0 %v650
        %v652 = vpop.xlane.xlu0 %651
        %v653 = vsel %vm146, %v632, 0.0
        %654 = vadd.xlane.f32.xlu0 %v653
        %v655 = vpop.xlane.xlu0 %654
        %v656 = vsel %vm146, %v634, 0.0
        %657 = vadd.xlane.f32.xlu0 %v656
        %v658 = vpop.xlane.xlu0 %657
        %v659 = vlog2.pop %v637
        %v660 = vmul.f32 %v659, 0.6931472
        %v661 = vlog2.pop %v640
        %v662 = vmul.f32 %v661, 0.6931472
        %v663 = vlog2.pop %v643
        %v664 = vmul.f32 %v663, 0.6931472
        %v665 = vlog2.pop %v646
        %v666 = vmul.f32 %v665, 0.6931472
        %v667 = vlog2.pop %v649
        %v668 = vmul.f32 %v667, 0.6931472
        %v669 = vlog2.pop %v652
        %v670 = vmul.f32 %v669, 0.6931472
        %v671 = vlog2.pop %v655
        %v672 = vmul.f32 %v671, 0.6931472
        %v673 = vlog2.pop %v658
        %v674 = vmul.f32 %v673, 0.6931472
        %v675 = vadd.f32 %v589, %v660
        %v676 = vadd.f32 %v592, %v662
        %v677 = vadd.f32 %v595, %v664
        %v678 = vadd.f32 %v598, %v666
        %v679 = vadd.f32 %v601, %v668
        %v680 = vadd.f32 %v604, %v670
        %v681 = vadd.f32 %v607, %v672
        %v682 = vadd.f32 %v610, %v674
        %v683 = vsub.f32 %v579, %v675
        %v684 = vsub.f32 %v580, %v676
        %v685 = vsub.f32 %v581, %v677
        %v686 = vsub.f32 %v582, %v678
        %v687 = vsub.f32 %v583, %v679
        %v688 = vsub.f32 %v584, %v680
        %v689 = vsub.f32 %v585, %v681
        %v690 = vsub.f32 %v586, %v682
        %v691 = vsel %vm146, %v683, -inf
        %v692 = vsel %vm146, %v684, -inf
        %v693 = vmax.f32 %v691, %v692
        %v694 = vrot.slane %v693, 4
        %v695 = vmax.f32 %v693, %v694
        %v696 = vrot.slane %v695, 2
        %v697 = vmax.f32 %v695, %v696
        %v698 = vrot.slane %v697, 1
        %v699 = vmax.f32 %v697, %v698
        %v700 = vsel %vm146, %v685, -inf
        %v701 = vsel %vm146, %v686, -inf
        %v702 = vmax.f32 %v700, %v701
        %v703 = vrot.slane %v702, 4
        %v704 = vmax.f32 %v702, %v703
        %v705 = vrot.slane %v704, 2
        %v706 = vmax.f32 %v704, %v705
        %v707 = vrot.slane %v706, 1
        %v708 = vmax.f32 %v706, %v707
        %v709 = vsel %vm146, %v687, -inf
        %v710 = vsel %vm146, %v688, -inf
        %v711 = vmax.f32 %v709, %v710
        %v712 = vrot.slane %v711, 4
        %v713 = vmax.f32 %v711, %v712
        %v714 = vrot.slane %v713, 2
        %v715 = vmax.f32 %v713, %v714
        %v716 = vrot.slane %v715, 1
        %v717 = vmax.f32 %v715, %v716
        %v718 = vsel %vm146, %v689, -inf
        %v719 = vsel %vm146, %v690, -inf
        %v720 = vmax.f32 %v718, %v719
        %v721 = vrot.slane %v720, 4
        %v722 = vmax.f32 %v720, %v721
        %v723 = vrot.slane %v722, 2
        %v724 = vmax.f32 %v722, %v723
        %v725 = vrot.slane %v724, 1
        %v726 = vmax.f32 %v724, %v725
        %v727 = vsub.f32 %v683, %v699
        %v728 = vsub.f32 %v684, %v699
        %v729 = vsub.f32 %v685, %v708
        %v730 = vsub.f32 %v686, %v708
        %v731 = vsub.f32 %v687, %v717
        %v732 = vsub.f32 %v688, %v717
        %v733 = vsub.f32 %v689, %v726
        %v734 = vsub.f32 %v690, %v726
        %v735 = vmul.f32 %v727, 1.442695
        %v736 = vpow.pop %v735
        %v737 = vmul.f32 %v728, 1.442695
        %v738 = vpow.pop %v737
        %v739 = vmul.f32 %v729, 1.442695
        %v740 = vpow.pop %v739
        %v741 = vmul.f32 %v730, 1.442695
        %v742 = vpow.pop %v741
        %v743 = vmul.f32 %v731, 1.442695
        %v744 = vpow.pop %v743
        %v745 = vmul.f32 %v732, 1.442695
        %v746 = vpow.pop %v745
        %v747 = vmul.f32 %v733, 1.442695
        %v748 = vpow.pop %v747
        %v749 = vmul.f32 %v734, 1.442695
        %v750 = vpow.pop %v749
        %v751 = vsel %vm146, %v736, 0.0
        %v752 = vsel %vm146, %v738, 0.0
        %v753 = vadd.f32 %v751, %v752
        %v754 = vrot.slane %v753, 4
        %v755 = vadd.f32 %v753, %v754
        %v756 = vrot.slane %v755, 2
        %v757 = vadd.f32 %v755, %v756
        %v758 = vrot.slane %v757, 1
        %v759 = vadd.f32 %v757, %v758
        %v760 = vsel %vm146, %v740, 0.0
        %v761 = vsel %vm146, %v742, 0.0
        %v762 = vadd.f32 %v760, %v761
        %v763 = vrot.slane %v762, 4
        %v764 = vadd.f32 %v762, %v763
        %v765 = vrot.slane %v764, 2
        %v766 = vadd.f32 %v764, %v765
        %v767 = vrot.slane %v766, 1
        %v768 = vadd.f32 %v766, %v767
        %v769 = vsel %vm146, %v744, 0.0
        %v770 = vsel %vm146, %v746, 0.0
        %v771 = vadd.f32 %v769, %v770
        %v772 = vrot.slane %v771, 4
        %v773 = vadd.f32 %v771, %v772
        %v774 = vrot.slane %v773, 2
        %v775 = vadd.f32 %v773, %v774
        %v776 = vrot.slane %v775, 1
        %v777 = vadd.f32 %v775, %v776
        %v778 = vsel %vm146, %v748, 0.0
        %v779 = vsel %vm146, %v750, 0.0
        %v780 = vadd.f32 %v778, %v779
        %v781 = vrot.slane %v780, 4
        %v782 = vadd.f32 %v780, %v781
        %v783 = vrot.slane %v782, 2
        %v784 = vadd.f32 %v782, %v783
        %v785 = vrot.slane %v784, 1
        %v786 = vadd.f32 %v784, %v785
        %v787 = vlog2.pop %v759
        %v788 = vmul.f32 %v787, 0.6931472
        %v789 = vlog2.pop %v768
        %v790 = vmul.f32 %v789, 0.6931472
        %v791 = vlog2.pop %v777
        %v792 = vmul.f32 %v791, 0.6931472
        %v793 = vlog2.pop %v786
        %v794 = vmul.f32 %v793, 0.6931472
        %v795 = vadd.f32 %v699, %v788
        %v796 = vadd.f32 %v708, %v790
        %v797 = vadd.f32 %v717, %v792
        %v798 = vadd.f32 %v726, %v794
        %v799 = vsub.f32 %v683, %v795
        %v800 = vsub.f32 %v684, %v795
        %v801 = vsub.f32 %v685, %v796
        %v802 = vsub.f32 %v686, %v796
        %v803 = vsub.f32 %v687, %v797
        %v804 = vsub.f32 %v688, %v797
        %v805 = vsub.f32 %v689, %v798
        %v806 = vsub.f32 %v690, %v798
        %v807 = vsel %vm146, %v799, -inf
        %808 = vmax.xlane.f32.xlu0 %v807
        %v809 = vpop.xlane.xlu0 %808
        %v810 = vsel %vm146, %v800, -inf
        %811 = vmax.xlane.f32.xlu0 %v810
        %v812 = vpop.xlane.xlu0 %811
        %v813 = vsel %vm146, %v801, -inf
        %814 = vmax.xlane.f32.xlu0 %v813
        %v815 = vpop.xlane.xlu0 %814
        %v816 = vsel %vm146, %v802, -inf
        %817 = vmax.xlane.f32.xlu0 %v816
        %v818 = vpop.xlane.xlu0 %817
        %v819 = vsel %vm146, %v803, -inf
        %820 = vmax.xlane.f32.xlu0 %v819
        %v821 = vpop.xlane.xlu0 %820
        %v822 = vsel %vm146, %v804, -inf
        %823 = vmax.xlane.f32.xlu0 %v822
        %v824 = vpop.xlane.xlu0 %823
        %v825 = vsel %vm146, %v805, -inf
        %826 = vmax.xlane.f32.xlu0 %v825
        %v827 = vpop.xlane.xlu0 %826
        %v828 = vsel %vm146, %v806, -inf
        %829 = vmax.xlane.f32.xlu0 %v828
        %v830 = vpop.xlane.xlu0 %829
        %v831 = vsub.f32 %v799, %v809
        %v832 = vsub.f32 %v800, %v812
        %v833 = vsub.f32 %v801, %v815
        %v834 = vsub.f32 %v802, %v818
        %v835 = vsub.f32 %v803, %v821
        %v836 = vsub.f32 %v804, %v824
        %v837 = vsub.f32 %v805, %v827
        %v838 = vsub.f32 %v806, %v830
        %v839 = vmul.f32 %v831, 1.442695
        %v840 = vpow.pop %v839
        %v841 = vmul.f32 %v832, 1.442695
        %v842 = vpow.pop %v841
        %v843 = vmul.f32 %v833, 1.442695
        %v844 = vpow.pop %v843
        %v845 = vmul.f32 %v834, 1.442695
        %v846 = vpow.pop %v845
        %v847 = vmul.f32 %v835, 1.442695
        %v848 = vpow.pop %v847
        %v849 = vmul.f32 %v836, 1.442695
        %v850 = vpow.pop %v849
        %v851 = vmul.f32 %v837, 1.442695
        %v852 = vpow.pop %v851
        %v853 = vmul.f32 %v838, 1.442695
        %v854 = vpow.pop %v853
        %v855 = vsel %vm146, %v840, 0.0
        %856 = vadd.xlane.f32.xlu0 %v855
        %v857 = vpop.xlane.xlu0 %856
        %v858 = vsel %vm146, %v842, 0.0
        %859 = vadd.xlane.f32.xlu0 %v858
        %v860 = vpop.xlane.xlu0 %859
        %v861 = vsel %vm146, %v844, 0.0
        %862 = vadd.xlane.f32.xlu0 %v861
        %v863 = vpop.xlane.xlu0 %862
        %v864 = vsel %vm146, %v846, 0.0
        %865 = vadd.xlane.f32.xlu0 %v864
        %v866 = vpop.xlane.xlu0 %865
        %v867 = vsel %vm146, %v848, 0.0
        %868 = vadd.xlane.f32.xlu0 %v867
        %v869 = vpop.xlane.xlu0 %868
        %v870 = vsel %vm146, %v850, 0.0
        %871 = vadd.xlane.f32.xlu0 %v870
        %v872 = vpop.xlane.xlu0 %871
        %v873 = vsel %vm146, %v852, 0.0
        %874 = vadd.xlane.f32.xlu0 %v873
        %v875 = vpop.xlane.xlu0 %874
        %v876 = vsel %vm146, %v854, 0.0
        %877 = vadd.xlane.f32.xlu0 %v876
        %v878 = vpop.xlane.xlu0 %877
        %v879 = vlog2.pop %v857
        %v880 = vmul.f32 %v879, 0.6931472
        %v881 = vlog2.pop %v860
        %v882 = vmul.f32 %v881, 0.6931472
        %v883 = vlog2.pop %v863
        %v884 = vmul.f32 %v883, 0.6931472
        %v885 = vlog2.pop %v866
        %v886 = vmul.f32 %v885, 0.6931472
        %v887 = vlog2.pop %v869
        %v888 = vmul.f32 %v887, 0.6931472
        %v889 = vlog2.pop %v872
        %v890 = vmul.f32 %v889, 0.6931472
        %v891 = vlog2.pop %v875
        %v892 = vmul.f32 %v891, 0.6931472
        %v893 = vlog2.pop %v878
        %v894 = vmul.f32 %v893, 0.6931472
        %v895 = vadd.f32 %v809, %v880
        %v896 = vadd.f32 %v812, %v882
        %v897 = vadd.f32 %v815, %v884
        %v898 = vadd.f32 %v818, %v886
        %v899 = vadd.f32 %v821, %v888
        %v900 = vadd.f32 %v824, %v890
        %v901 = vadd.f32 %v827, %v892
        %v902 = vadd.f32 %v830, %v894
        %v903 = vsub.f32 %v799, %v895
        %v904 = vsub.f32 %v800, %v896
        %v905 = vsub.f32 %v801, %v897
        %v906 = vsub.f32 %v802, %v898
        %v907 = vsub.f32 %v803, %v899
        %v908 = vsub.f32 %v804, %v900
        %v909 = vsub.f32 %v805, %v901
        %v910 = vsub.f32 %v806, %v902
        %v911 = vsel %vm146, %v903, -inf
        %v912 = vsel %vm146, %v904, -inf
        %v913 = vmax.f32 %v911, %v912
        %v914 = vrot.slane %v913, 4
        %v915 = vmax.f32 %v913, %v914
        %v916 = vrot.slane %v915, 2
        %v917 = vmax.f32 %v915, %v916
        %v918 = vrot.slane %v917, 1
        %v919 = vmax.f32 %v917, %v918
        %v920 = vsel %vm146, %v905, -inf
        %v921 = vsel %vm146, %v906, -inf
        %v922 = vmax.f32 %v920, %v921
        %v923 = vrot.slane %v922, 4
        %v924 = vmax.f32 %v922, %v923
        %v925 = vrot.slane %v924, 2
        %v926 = vmax.f32 %v924, %v925
        %v927 = vrot.slane %v926, 1
        %v928 = vmax.f32 %v926, %v927
        %v929 = vsel %vm146, %v907, -inf
        %v930 = vsel %vm146, %v908, -inf
        %v931 = vmax.f32 %v929, %v930
        %v932 = vrot.slane %v931, 4
        %v933 = vmax.f32 %v931, %v932
        %v934 = vrot.slane %v933, 2
        %v935 = vmax.f32 %v933, %v934
        %v936 = vrot.slane %v935, 1
        %v937 = vmax.f32 %v935, %v936
        %v938 = vsel %vm146, %v909, -inf
        %v939 = vsel %vm146, %v910, -inf
        %v940 = vmax.f32 %v938, %v939
        %v941 = vrot.slane %v940, 4
        %v942 = vmax.f32 %v940, %v941
        %v943 = vrot.slane %v942, 2
        %v944 = vmax.f32 %v942, %v943
        %v945 = vrot.slane %v944, 1
        %v946 = vmax.f32 %v944, %v945
        %v947 = vsub.f32 %v903, %v919
        %v948 = vsub.f32 %v904, %v919
        %v949 = vsub.f32 %v905, %v928
        %v950 = vsub.f32 %v906, %v928
        %v951 = vsub.f32 %v907, %v937
        %v952 = vsub.f32 %v908, %v937
        %v953 = vsub.f32 %v909, %v946
        %v954 = vsub.f32 %v910, %v946
        %v955 = vmul.f32 %v947, 1.442695
        %v956 = vpow.pop %v955
        %v957 = vmul.f32 %v948, 1.442695
        %v958 = vpow.pop %v957
        %v959 = vmul.f32 %v949, 1.442695
        %v960 = vpow.pop %v959
        %v961 = vmul.f32 %v950, 1.442695
        %v962 = vpow.pop %v961
        %v963 = vmul.f32 %v951, 1.442695
        %v964 = vpow.pop %v963
        %v965 = vmul.f32 %v952, 1.442695
        %v966 = vpow.pop %v965
        %v967 = vmul.f32 %v953, 1.442695
        %v968 = vpow.pop %v967
        %v969 = vmul.f32 %v954, 1.442695
        %v970 = vpow.pop %v969
        %v971 = vsel %vm146, %v956, 0.0
        %v972 = vsel %vm146, %v958, 0.0
        %v973 = vadd.f32 %v971, %v972
        %v974 = vrot.slane %v973, 4
        %v975 = vadd.f32 %v973, %v974
        %v976 = vrot.slane %v975, 2
        %v977 = vadd.f32 %v975, %v976
        %v978 = vrot.slane %v977, 1
        %v979 = vadd.f32 %v977, %v978
        %v980 = vsel %vm146, %v960, 0.0
        %v981 = vsel %vm146, %v962, 0.0
        %v982 = vadd.f32 %v980, %v981
        %v983 = vrot.slane %v982, 4
        %v984 = vadd.f32 %v982, %v983
        %v985 = vrot.slane %v984, 2
        %v986 = vadd.f32 %v984, %v985
        %v987 = vrot.slane %v986, 1
        %v988 = vadd.f32 %v986, %v987
        %v989 = vsel %vm146, %v964, 0.0
        %v990 = vsel %vm146, %v966, 0.0
        %v991 = vadd.f32 %v989, %v990
        %v992 = vrot.slane %v991, 4
        %v993 = vadd.f32 %v991, %v992
        %v994 = vrot.slane %v993, 2
        %v995 = vadd.f32 %v993, %v994
        %v996 = vrot.slane %v995, 1
        %v997 = vadd.f32 %v995, %v996
        %v998 = vsel %vm146, %v968, 0.0
        %v999 = vsel %vm146, %v970, 0.0
        %v1000 = vadd.f32 %v998, %v999
        %v1001 = vrot.slane %v1000, 4
        %v1002 = vadd.f32 %v1000, %v1001
        %v1003 = vrot.slane %v1002, 2
        %v1004 = vadd.f32 %v1002, %v1003
        %v1005 = vrot.slane %v1004, 1
        %v1006 = vadd.f32 %v1004, %v1005
        %v1007 = vlog2.pop %v979
        %v1008 = vmul.f32 %v1007, 0.6931472
        %v1009 = vlog2.pop %v988
        %v1010 = vmul.f32 %v1009, 0.6931472
        %v1011 = vlog2.pop %v997
        %v1012 = vmul.f32 %v1011, 0.6931472
        %v1013 = vlog2.pop %v1006
        %v1014 = vmul.f32 %v1013, 0.6931472
        %v1015 = vadd.f32 %v919, %v1008
        %v1016 = vadd.f32 %v928, %v1010
        %v1017 = vadd.f32 %v937, %v1012
        %v1018 = vadd.f32 %v946, %v1014
        %v1019 = vsub.f32 %v903, %v1015
        %v1020 = vsub.f32 %v904, %v1015
        %v1021 = vsub.f32 %v905, %v1016
        %v1022 = vsub.f32 %v906, %v1016
        %v1023 = vsub.f32 %v907, %v1017
        %v1024 = vsub.f32 %v908, %v1017
        %v1025 = vsub.f32 %v909, %v1018
        %v1026 = vsub.f32 %v910, %v1018
        %v1027 = vsel %vm146, %v1019, -inf
        %1028 = vmax.xlane.f32.xlu0 %v1027
        %v1029 = vpop.xlane.xlu0 %1028
        %v1030 = vsel %vm146, %v1020, -inf
        %1031 = vmax.xlane.f32.xlu0 %v1030
        %v1032 = vpop.xlane.xlu0 %1031
        %v1033 = vsel %vm146, %v1021, -inf
        %1034 = vmax.xlane.f32.xlu0 %v1033
        %v1035 = vpop.xlane.xlu0 %1034
        %v1036 = vsel %vm146, %v1022, -inf
        %1037 = vmax.xlane.f32.xlu0 %v1036
        %v1038 = vpop.xlane.xlu0 %1037
        %v1039 = vsel %vm146, %v1023, -inf
        %1040 = vmax.xlane.f32.xlu0 %v1039
        %v1041 = vpop.xlane.xlu0 %1040
        %v1042 = vsel %vm146, %v1024, -inf
        %1043 = vmax.xlane.f32.xlu0 %v1042
        %v1044 = vpop.xlane.xlu0 %1043
        %v1045 = vsel %vm146, %v1025, -inf
        %1046 = vmax.xlane.f32.xlu0 %v1045
        %v1047 = vpop.xlane.xlu0 %1046
        %v1048 = vsel %vm146, %v1026, -inf
        %1049 = vmax.xlane.f32.xlu0 %v1048
        %v1050 = vpop.xlane.xlu0 %1049
        %v1051 = vsub.f32 %v1019, %v1029
        %v1052 = vsub.f32 %v1020, %v1032
        %v1053 = vsub.f32 %v1021, %v1035
        %v1054 = vsub.f32 %v1022, %v1038
        %v1055 = vsub.f32 %v1023, %v1041
        %v1056 = vsub.f32 %v1024, %v1044
        %v1057 = vsub.f32 %v1025, %v1047
        %v1058 = vsub.f32 %v1026, %v1050
        %v1059 = vmul.f32 %v1051, 1.442695
        %v1060 = vpow.pop %v1059
        %v1061 = vmul.f32 %v1052, 1.442695
        %v1062 = vpow.pop %v1061
        %v1063 = vmul.f32 %v1053, 1.442695
        %v1064 = vpow.pop %v1063
        %v1065 = vmul.f32 %v1054, 1.442695
        %v1066 = vpow.pop %v1065
        %v1067 = vmul.f32 %v1055, 1.442695
        %v1068 = vpow.pop %v1067
        %v1069 = vmul.f32 %v1056, 1.442695
        %v1070 = vpow.pop %v1069
        %v1071 = vmul.f32 %v1057, 1.442695
        %v1072 = vpow.pop %v1071
        %v1073 = vmul.f32 %v1058, 1.442695
        %v1074 = vpow.pop %v1073
        %v1075 = vsel %vm146, %v1060, 0.0
        %1076 = vadd.xlane.f32.xlu0 %v1075
        %v1077 = vpop.xlane.xlu0 %1076
        %v1078 = vsel %vm146, %v1062, 0.0
        %1079 = vadd.xlane.f32.xlu0 %v1078
        %v1080 = vpop.xlane.xlu0 %1079
        %v1081 = vsel %vm146, %v1064, 0.0
        %1082 = vadd.xlane.f32.xlu0 %v1081
        %v1083 = vpop.xlane.xlu0 %1082
        %v1084 = vsel %vm146, %v1066, 0.0
        %1085 = vadd.xlane.f32.xlu0 %v1084
        %v1086 = vpop.xlane.xlu0 %1085
        %v1087 = vsel %vm146, %v1068, 0.0
        %1088 = vadd.xlane.f32.xlu0 %v1087
        %v1089 = vpop.xlane.xlu0 %1088
        %v1090 = vsel %vm146, %v1070, 0.0
        %1091 = vadd.xlane.f32.xlu0 %v1090
        %v1092 = vpop.xlane.xlu0 %1091
        %v1093 = vsel %vm146, %v1072, 0.0
        %1094 = vadd.xlane.f32.xlu0 %v1093
        %v1095 = vpop.xlane.xlu0 %1094
        %v1096 = vsel %vm146, %v1074, 0.0
        %1097 = vadd.xlane.f32.xlu0 %v1096
        %v1098 = vpop.xlane.xlu0 %1097
        %v1099 = vlog2.pop %v1077
        %v1100 = vmul.f32 %v1099, 0.6931472
        %v1101 = vlog2.pop %v1080
        %v1102 = vmul.f32 %v1101, 0.6931472
        %v1103 = vlog2.pop %v1083
        %v1104 = vmul.f32 %v1103, 0.6931472
        %v1105 = vlog2.pop %v1086
        %v1106 = vmul.f32 %v1105, 0.6931472
        %v1107 = vlog2.pop %v1089
        %v1108 = vmul.f32 %v1107, 0.6931472
        %v1109 = vlog2.pop %v1092
        %v1110 = vmul.f32 %v1109, 0.6931472
        %v1111 = vlog2.pop %v1095
        %v1112 = vmul.f32 %v1111, 0.6931472
        %v1113 = vlog2.pop %v1098
        %v1114 = vmul.f32 %v1113, 0.6931472
        %v1115 = vadd.f32 %v1029, %v1100
        %v1116 = vadd.f32 %v1032, %v1102
        %v1117 = vadd.f32 %v1035, %v1104
        %v1118 = vadd.f32 %v1038, %v1106
        %v1119 = vadd.f32 %v1041, %v1108
        %v1120 = vadd.f32 %v1044, %v1110
        %v1121 = vadd.f32 %v1047, %v1112
        %v1122 = vadd.f32 %v1050, %v1114
        %v1123 = vsub.f32 %v1019, %v1115
        %v1124 = vsub.f32 %v1020, %v1116
        %v1125 = vsub.f32 %v1021, %v1117
        %v1126 = vsub.f32 %v1022, %v1118
        %v1127 = vsub.f32 %v1023, %v1119
        %v1128 = vsub.f32 %v1024, %v1120
        %v1129 = vsub.f32 %v1025, %v1121
        %v1130 = vsub.f32 %v1026, %v1122
        %v1131 = vsel %vm146, %v1123, -inf
        %v1132 = vsel %vm146, %v1124, -inf
        %v1133 = vmax.f32 %v1131, %v1132
        %v1134 = vrot.slane %v1133, 4
        %v1135 = vmax.f32 %v1133, %v1134
        %v1136 = vrot.slane %v1135, 2
        %v1137 = vmax.f32 %v1135, %v1136
        %v1138 = vrot.slane %v1137, 1
        %v1139 = vmax.f32 %v1137, %v1138
        %v1140 = vsel %vm146, %v1125, -inf
        %v1141 = vsel %vm146, %v1126, -inf
        %v1142 = vmax.f32 %v1140, %v1141
        %v1143 = vrot.slane %v1142, 4
        %v1144 = vmax.f32 %v1142, %v1143
        %v1145 = vrot.slane %v1144, 2
        %v1146 = vmax.f32 %v1144, %v1145
        %v1147 = vrot.slane %v1146, 1
        %v1148 = vmax.f32 %v1146, %v1147
        %v1149 = vsel %vm146, %v1127, -inf
        %v1150 = vsel %vm146, %v1128, -inf
        %v1151 = vmax.f32 %v1149, %v1150
        %v1152 = vrot.slane %v1151, 4
        %v1153 = vmax.f32 %v1151, %v1152
        %v1154 = vrot.slane %v1153, 2
        %v1155 = vmax.f32 %v1153, %v1154
        %v1156 = vrot.slane %v1155, 1
        %v1157 = vmax.f32 %v1155, %v1156
        %v1158 = vsel %vm146, %v1129, -inf
        %v1159 = vsel %vm146, %v1130, -inf
        %v1160 = vmax.f32 %v1158, %v1159
        %v1161 = vrot.slane %v1160, 4
        %v1162 = vmax.f32 %v1160, %v1161
        %v1163 = vrot.slane %v1162, 2
        %v1164 = vmax.f32 %v1162, %v1163
        %v1165 = vrot.slane %v1164, 1
        %v1166 = vmax.f32 %v1164, %v1165
        %v1167 = vsub.f32 %v1123, %v1139
        %v1168 = vsub.f32 %v1124, %v1139
        %v1169 = vsub.f32 %v1125, %v1148
        %v1170 = vsub.f32 %v1126, %v1148
        %v1171 = vsub.f32 %v1127, %v1157
        %v1172 = vsub.f32 %v1128, %v1157
        %v1173 = vsub.f32 %v1129, %v1166
        %v1174 = vsub.f32 %v1130, %v1166
        %v1175 = vmul.f32 %v1167, 1.442695
        %v1176 = vpow.pop %v1175
        %v1177 = vmul.f32 %v1168, 1.442695
        %v1178 = vpow.pop %v1177
        %v1179 = vmul.f32 %v1169, 1.442695
        %v1180 = vpow.pop %v1179
        %v1181 = vmul.f32 %v1170, 1.442695
        %v1182 = vpow.pop %v1181
        %v1183 = vmul.f32 %v1171, 1.442695
        %v1184 = vpow.pop %v1183
        %v1185 = vmul.f32 %v1172, 1.442695
        %v1186 = vpow.pop %v1185
        %v1187 = vmul.f32 %v1173, 1.442695
        %v1188 = vpow.pop %v1187
        %v1189 = vmul.f32 %v1174, 1.442695
        %v1190 = vpow.pop %v1189
        %v1191 = vsel %vm146, %v1176, 0.0
        %v1192 = vsel %vm146, %v1178, 0.0
        %v1193 = vadd.f32 %v1191, %v1192
        %v1194 = vrot.slane %v1193, 4
        %v1195 = vadd.f32 %v1193, %v1194
        %v1196 = vrot.slane %v1195, 2
        %v1197 = vadd.f32 %v1195, %v1196
        %v1198 = vrot.slane %v1197, 1
        %v1199 = vadd.f32 %v1197, %v1198
        %v1200 = vsel %vm146, %v1180, 0.0
        %v1201 = vsel %vm146, %v1182, 0.0
        %v1202 = vadd.f32 %v1200, %v1201
        %v1203 = vrot.slane %v1202, 4
        %v1204 = vadd.f32 %v1202, %v1203
        %v1205 = vrot.slane %v1204, 2
        %v1206 = vadd.f32 %v1204, %v1205
        %v1207 = vrot.slane %v1206, 1
        %v1208 = vadd.f32 %v1206, %v1207
        %v1209 = vsel %vm146, %v1184, 0.0
        %v1210 = vsel %vm146, %v1186, 0.0
        %v1211 = vadd.f32 %v1209, %v1210
        %v1212 = vrot.slane %v1211, 4
        %v1213 = vadd.f32 %v1211, %v1212
        %v1214 = vrot.slane %v1213, 2
        %v1215 = vadd.f32 %v1213, %v1214
        %v1216 = vrot.slane %v1215, 1
        %v1217 = vadd.f32 %v1215, %v1216
        %v1218 = vsel %vm146, %v1188, 0.0
        %v1219 = vsel %vm146, %v1190, 0.0
        %v1220 = vadd.f32 %v1218, %v1219
        %v1221 = vrot.slane %v1220, 4
        %v1222 = vadd.f32 %v1220, %v1221
        %v1223 = vrot.slane %v1222, 2
        %v1224 = vadd.f32 %v1222, %v1223
        %v1225 = vrot.slane %v1224, 1
        %v1226 = vadd.f32 %v1224, %v1225
        %v1227 = vlog2.pop %v1199
        %v1228 = vmul.f32 %v1227, 0.6931472
        %v1229 = vlog2.pop %v1208
        %v1230 = vmul.f32 %v1229, 0.6931472
        %v1231 = vlog2.pop %v1217
        %v1232 = vmul.f32 %v1231, 0.6931472
        %v1233 = vlog2.pop %v1226
        %v1234 = vmul.f32 %v1233, 0.6931472
        %v1235 = vadd.f32 %v1139, %v1228
        %v1236 = vadd.f32 %v1148, %v1230
        %v1237 = vadd.f32 %v1157, %v1232
        %v1238 = vadd.f32 %v1166, %v1234
        %v1239 = vsub.f32 %v1123, %v1235
        %v1240 = vsub.f32 %v1124, %v1235
        %v1241 = vsub.f32 %v1125, %v1236
        %v1242 = vsub.f32 %v1126, %v1236
        %v1243 = vsub.f32 %v1127, %v1237
        %v1244 = vsub.f32 %v1128, %v1237
        %v1245 = vsub.f32 %v1129, %v1238
        %v1246 = vsub.f32 %v1130, %v1238
        %v1247 = vmul.f32 %v1239, 1.442695
        %v1248 = vpow.pop %v1247
        %v1249 = vmul.f32 %v1240, 1.442695
        %v1250 = vpow.pop %v1249
        %v1251 = vmul.f32 %v1241, 1.442695
        %v1252 = vpow.pop %v1251
        %v1253 = vmul.f32 %v1242, 1.442695
        %v1254 = vpow.pop %v1253
        %v1255 = vmul.f32 %v1243, 1.442695
        %v1256 = vpow.pop %v1255
        %v1257 = vmul.f32 %v1244, 1.442695
        %v1258 = vpow.pop %v1257
        %v1259 = vmul.f32 %v1245, 1.442695
        %v1260 = vpow.pop %v1259
        %v1261 = vmul.f32 %v1246, 1.442695
        %v1262 = vpow.pop %v1261
        %1263 = vst.msk [vmem:[%s135] sm:$0xff] %vm146, %v1248
        %1264 = vst.msk [vmem:[%s135 + $0x8] sm:$0xff] %vm146, %v1250
        %1265 = vst.msk [vmem:[%s135 + $0x10] sm:$0xff] %vm146, %v1252
        %1266 = vst.msk [vmem:[%s135 + $0x18] sm:$0xff] %vm146, %v1254
        %1267 = vst.msk [vmem:[%s135 + $0x20] sm:$0xff] %vm146, %v1256
        %1268 = vst.msk [vmem:[%s135 + $0x28] sm:$0xff] %vm146, %v1258
        %1269 = vst.msk [vmem:[%s135 + $0x30] sm:$0xff] %vm146, %v1260
        %1270 = vst.msk [vmem:[%s135 + $0x38] sm:$0xff] %vm146, %v1262
        %s1271 = sand.u32 %s52, 1
        %s1272 = scalar_lea.sflag [#allocation4], %s1271
        %s1273 = sand.u32 %s52, 1
        %s1274 = smul.addr %s1273, 64
        %s1275 = scalar_lea.vmem [#allocation5], %s1274
        // Predicated region
        $region29: #{tpu_custom_call.1} parent=23 // pred_check
          %p1276 = pneg %p62
        $region30: #{tpu_custom_call.1} parent=23 // pred_check_branch
          %1278 = sbr.rel (%p1276) target = $region32
        $region31: #{tpu_custom_call.1} parent=23 // pred_region
          %s1279 = smul.u32 4, %s18
          %s1281 = ssub.s32 1024, 1024
          %1282 = vsyncadd %s1272, %s1281
          %s1283 = smul.addr %s1279, 2
          %s1284 = smul.addr %s1283, 128
          %s1285 = scalar_lea.hbm %s1, %s1284
          %s1286 = sshll.u32 %s1275, 4
          %s1287 = int_to_ptr.vmem [resolvable:$true] %s1286
          %1292 = dma.vmem_to_hbm [thread:$0]  %s1287, 1024, %s1285, %s1272, 128, 128, 8
        $region32: #{tpu_custom_call.1} parent=23 // pred_fallthru
          _
      $region24: #{tpu_custom_call.1} parent=5 // pred_fallthru
        _
      %p1293 = scmp.le.s32.totalorder 2, %s13
      // Predicated region
      $region33: #{tpu_custom_call.1} parent=5 // pred_check
        %p1294 = pneg %p1293
      $region34: #{tpu_custom_call.1} parent=5 // pred_check_branch
        %1296 = sbr.rel (%p1294) target = $region36
      $region35: #{tpu_custom_call.1} parent=5 // pred_region
        %s1297 = ssub.s32 %s13, 2
        // Predicated region
        $region37: #{tpu_custom_call.1} parent=35 // pred_check
          %p1298 = pneg %p68
        $region38: #{tpu_custom_call.1} parent=35 // pred_check_branch
          %1300 = sbr.rel (%p1298) target = $region40
        $region39: #{tpu_custom_call.1} parent=35 // pred_region
          %s1301 = sand.u32 %s53, 1
          %s1302 = scalar_lea.sflag [#allocation4], %s1301
          %s1303 = sand.u32 %s53, 1
          %s1304 = smul.addr %s1303, 64
          %s1305 = scalar_lea.vmem [#allocation5], %s1304
          %1306 = dma.done %s1302, 1024
        $region40: #{tpu_custom_call.1} parent=35 // pred_fallthru
          _
      $region36: #{tpu_custom_call.1} parent=5 // pred_fallthru
        _
    $region6: #{tpu_custom_call.1} parent=1 // loop_footer
      %s17 = sadd.s32 1, %s13
    $region7: #{tpu_custom_call.1} parent=1 // loop_footer_branch
      %12 = sbr.rel target = $region3
    $region8: #{tpu_custom_call.1} parent=1 // loop_exit
      _
    %1307 = vsyncpa [#allocation3], 1
    %s1308 = scalar_lea.sflag [#allocation3], 1
    %1309 = vsyncpa %s1308, 1
    %1310 = vsyncpa [#allocation4], 1
    %s1311 = scalar_lea.sflag [#allocation4], 1
    %1312 = vsyncpa %s1311, 1

</llo_original>
